<compile_context>
chip_gen: v6e
topology: v6e:2x2x1
jax: 0.10.0
libtpu: 0.0.40
codegen_flags: <defaults>
</compile_context>

<pallas_src>
import functools
import math

import jax
import jax.numpy as jnp
from jax.experimental import pallas as pl
from jax.experimental.pallas import tpu as pltpu


# ----------------------------------------------------------------------------
# Kernel 1: fused Q/K/V projection   y = x @ W_qkv + b_qkv
# ----------------------------------------------------------------------------
def qkv_proj_kernel(x_ref, w_ref, b_ref, o_ref):
    # [tm, Din] @ [Din, 3H] -> [tm, 3H] on the MXU, f32 accumulate.
    y = jnp.dot(x_ref[...], w_ref[...], preferred_element_type=jnp.float32)
    y = y + b_ref[...].astype(jnp.float32)
    o_ref[...] = y.astype(o_ref.dtype)


def _pick_row_tile(m, want):
    """Largest multiple of 8 that divides m and is <= want; falls back to m."""
    t = min(want, m)
    t -= t % 8
    while t >= 8:
        if m % t == 0:
            return t
        t -= 8
    return m


def qkv_projection(x, w_qkv, b_qkv, *, tm=256):
    """x: [B, S, Din]; w_qkv: [Din, 3*H]; b_qkv: [1, 3*H] -> [B, S, 3*H]."""
    B, S, Din = x.shape
    out_dim = w_qkv.shape[1]
    M = B * S
    tm = _pick_row_tile(M, tm)
    x2 = x.reshape(M, Din)

    # TODO(synk): at v5e production sizes, add a K grid axis (tk~512) + f32 VMEM
    # accumulator so the fused weight is streamed instead of fully resident.
    out = pl.pallas_call(
        qkv_proj_kernel,
        out_shape=jax.ShapeDtypeStruct((M, out_dim), x.dtype),
        grid_spec=pltpu.PrefetchScalarGridSpec(
            num_scalar_prefetch=0,
            grid=(M // tm,),
            in_specs=[
                pl.BlockSpec((tm, Din), lambda i: (i, 0)),        # activation rows
                # Weight / bias never change across the grid -> single-buffer them.
                pl.BlockSpec((Din, out_dim), lambda i: (0, 0),
                             pipeline_mode=pl.Buffered(1)),
                pl.BlockSpec((1, out_dim), lambda i: (0, 0),
                             pipeline_mode=pl.Buffered(1)),
            ],
            out_specs=pl.BlockSpec((tm, out_dim), lambda i: (i, 0)),
        ),
        compiler_params=pltpu.CompilerParams(
            dimension_semantics=("parallel",)),
    )(x2, w_qkv, b_qkv)
    return out.reshape(B, S, out_dim)


# ----------------------------------------------------------------------------
# Kernel 2: cross attention for one batch element, ALL heads in one grid step.
#   For each head h: ctx_h = softmax(q_h @ k_h^T + mask) @ v_h
#   (1/sqrt(dh) is already folded into Wq/bq.)
#   Output is stored merged-head and lane-dense: [Sq, H].
# ----------------------------------------------------------------------------
def bi_attn_kernel(q_ref, k_ref, v_ref, mask_ref, o_ref, *, num_heads):
    q = q_ref[0]                                  # [Sq, H]  (operand dtype kept: f32/bf16)
    k = k_ref[0]                                  # [Sk, H]
    v = v_ref[0]                                  # [Sk, H]
    mask = mask_ref[0].astype(jnp.float32)        # [1, Sk] additive; bcast over rows

    H = q.shape[-1]
    dh = H // num_heads

    # TODO(synk): for sequence lengths >~1k, tile over Sk with an online-softmax
    # (flash-style) accumulator instead of materializing the full [Sq, Sk] scores.
    out_parts = []
    for h in range(num_heads):                    # static unroll over heads
        lo = h * dh
        qh = q[:, lo:lo + dh]
        kh = k[:, lo:lo + dh]
        vh = v[:, lo:lo + dh]

        # scores = q_h @ k_h^T (contract head dim directly; no transpose materialized)
        s = jax.lax.dot_general(qh, kh, (((1,), (1,)), ((), ())),
                                preferred_element_type=jnp.float32)
        s = s + mask

        # numerically-stable softmax in f32; normalize via EUP approx reciprocal
        m = jnp.max(s, axis=-1, keepdims=True)
        p = jnp.exp(s - m)
        denom = jnp.sum(p, axis=-1, keepdims=True)
        probs = p * pl.reciprocal(denom, approx=True)
        # TODO(synk): attention-probs dropout is identity (eval mode); training mode
        # would need pltpu.prng_seed / pltpu.prng_random_bits masking here.

        out_parts.append(
            jnp.dot(probs.astype(vh.dtype), vh, preferred_element_type=jnp.float32))

    # Single lane-dense store of the merged-head context.
    o_ref[0] = jnp.concatenate(out_parts, axis=-1).astype(o_ref.dtype)


def cross_attention(qkv_q, qkv_kv, mask, *, num_heads):
    """qkv_q: [B, Sq, 3H] (query stream); qkv_kv: [B, Sk, 3H] (key/value stream);
    mask: [B, 1, Sk] additive. Returns merged-head context [B, Sq, H]."""
    B, Sq, three_h = qkv_q.shape
    H = three_h // 3
    Sk = qkv_kv.shape[1]

    if H % 128 == 0:
        # Fast path: select Q / K / V via block indices on the last (3H) dim so the
        # DMA only moves the H-wide slab that is actually needed.
        q_in, k_in, v_in = qkv_q, qkv_kv, qkv_kv
        q_map = lambda b: (b, 0, 0)
        k_map = lambda b: (b, 0, 1)
        v_map = lambda b: (b, 0, 2)
    else:
        # Fallback for H not a multiple of 128 (lane constraint on partial blocks):
        # slice once at the XLA level (small configs only, e.g. this demo if shrunk).
        q_in = qkv_q[..., 0 * H:1 * H]
        k_in = qkv_kv[..., 1 * H:2 * H]
        v_in = qkv_kv[..., 2 * H:3 * H]
        q_map = k_map = v_map = lambda b: (b, 0, 0)

    return pl.pallas_call(
        functools.partial(bi_attn_kernel, num_heads=num_heads),
        out_shape=jax.ShapeDtypeStruct((B, Sq, H), qkv_q.dtype),
        grid_spec=pltpu.PrefetchScalarGridSpec(
            num_scalar_prefetch=0,
            grid=(B,),                       # all heads handled inside one grid step
            in_specs=[
                pl.BlockSpec((1, Sq, H), q_map),
                pl.BlockSpec((1, Sk, H), k_map),
                pl.BlockSpec((1, Sk, H), v_map),
                pl.BlockSpec((1, 1, Sk), lambda b: (b, 0, 0)),
            ],
            out_specs=pl.BlockSpec((1, Sq, H), lambda b: (b, 0, 0)),
        ),
        compiler_params=pltpu.CompilerParams(
            dimension_semantics=("parallel",)),   # B shards across v7x TensorCores
    )(q_in, k_in, v_in, mask)


# ----------------------------------------------------------------------------
# Module wrapper
# ----------------------------------------------------------------------------
def prepare_params(wq1, bq1, wk1, bk1, wv1, bv1,
                   wq2, bq2, wk2, bk2, wv2, bv2,
                   *, num_attention_heads, dtype=None):
    """One-time prep: transpose torch-layout Linear weights ([out, in]), fuse Q/K/V,
    and fold the 1/sqrt(dh) attention scale into the query weight/bias."""
    all_head = wq1.shape[0]
    dh = all_head // num_attention_heads
    scale = 1.0 / math.sqrt(dh)
    w1 = jnp.concatenate([wq1.T * scale, wk1.T, wv1.T], axis=1)   # [v_hidden, 3*H]
    b1 = jnp.concatenate([bq1 * scale, bk1, bv1]).reshape(1, -1)
    w2 = jnp.concatenate([wq2.T * scale, wk2.T, wv2.T], axis=1)   # [hidden,   3*H]
    b2 = jnp.concatenate([bq2 * scale, bk2, bv2]).reshape(1, -1)
    if dtype is not None:  # e.g. jnp.bfloat16 on v6e/v7x: half the weight VMEM/HBM bytes
        w1, b1, w2, b2 = (t.astype(dtype) for t in (w1, b1, w2, b2))
    return w1, b1, w2, b2


def bert_bi_attention(input_tensor1, attention_mask1, input_tensor2, attention_mask2,
                      params, *, num_attention_heads,
                      co_attention_mask=None, use_co_attention_mask=False,
                      visualization=False, tm=256):
    """Eval-mode BertBiAttention forward. Masks are additive, shape [B, 1, 1, S]."""
    del co_attention_mask, use_co_attention_mask   # unused in the reference forward
    w1_qkv, b1_qkv, w2_qkv, b2_qkv = params
    B, S1, _ = input_tensor1.shape
    _, S2, _ = input_tensor2.shape

    # Fused Q/K/V projections per stream (lane-dense 3*H output).
    qkv1 = qkv_projection(input_tensor1, w1_qkv, b1_qkv, tm=tm)   # [B, S1, 3H]
    qkv2 = qkv_projection(input_tensor2, w2_qkv, b2_qkv, tm=tm)   # [B, S2, 3H]

    m1 = attention_mask1.reshape(B, 1, S1)   # additive mask over visual keys
    m2 = attention_mask2.reshape(B, 1, S2)   # additive mask over text keys

    # context1: text (stream-2) queries attend over visual (stream-1) keys/values
    context_layer1 = cross_attention(qkv2, qkv1, m1, num_heads=num_attention_heads)
    # context2: visual (stream-1) queries attend over text (stream-2) keys/values
    context_layer2 = cross_attention(qkv1, qkv2, m2, num_heads=num_attention_heads)

    attn_data = None
    # TODO(synk): visualization=True would require returning attention probs as an
    # extra kernel output (attn1/attn2/queries/keys dict); omitted here.
    return context_layer1, context_layer2, attn_data


# ----------------------------------------------------------------------------
# Pure-JAX reference (mirrors the PyTorch forward, eval mode)
# ----------------------------------------------------------------------------
def reference(inp1, mask1, inp2, mask2, weights, num_heads):
    (wq1, bq1, wk1, bk1, wv1, bv1, wq2, bq2, wk2, bk2, wv2, bv2) = weights

    def lin(x, w, b):
        return jnp.einsum("bsd,od->bso", x, w) + b

    def split(x):
        B, S, H = x.shape
        d = H // num_heads
        return x.reshape(B, S, num_heads, d).transpose(0, 2, 1, 3)

    q1, k1, v1 = split(lin(inp1, wq1, bq1)), split(lin(inp1, wk1, bk1)), split(lin(inp1, wv1, bv1))
    q2, k2, v2 = split(lin(inp2, wq2, bq2)), split(lin(inp2, wk2, bk2)), split(lin(inp2, wv2, bv2))
    dh = q1.shape[-1]

    s1 = jnp.einsum("bhqd,bhkd->bhqk", q2, k1) / math.sqrt(dh) + mask1
    p1 = jax.nn.softmax(s1, axis=-1)
    c1 = jnp.einsum("bhqk,bhkd->bhqd", p1, v1)
    c1 = c1.transpose(0, 2, 1, 3).reshape(inp2.shape[0], inp2.shape[1], -1)

    s2 = jnp.einsum("bhqd,bhkd->bhqk", q1, k2) / math.sqrt(dh) + mask2
    p2 = jax.nn.softmax(s2, axis=-1)
    c2 = jnp.einsum("bhqk,bhkd->bhqd", p2, v2)
    c2 = c2.transpose(0, 2, 1, 3).reshape(inp1.shape[0], inp1.shape[1], -1)
    return c1, c2


if __name__ == "__main__":
    # Small config consistent with the module: two streams, bi_hidden=128, 2 heads
    # (scaled-down ViLBERT, whose bi_hidden=1024 / 8 heads). B is even for v7x 2-TC.
    B, S1, S2 = 2, 16, 8
    v_hidden, hidden, bi_hidden, num_heads = 64, 32, 128, 2

    key = jax.random.PRNGKey(0)
    keys = jax.random.split(key, 12)

    input_tensor1 = jax.random.normal(keys[0], (B, S1, v_hidden), dtype=jnp.float32)
    input_tensor2 = jax.random.normal(keys[1], (B, S2, hidden), dtype=jnp.float32)

    # Additive attention masks, torch convention: 0 = keep, -10000 = masked.
    keep1 = (jax.random.uniform(keys[2], (B, S1)) < 0.8).astype(jnp.float32)
    keep2 = (jax.random.uniform(keys[3], (B, S2)) < 0.8).astype(jnp.float32)
    attention_mask1 = ((1.0 - keep1) * -10000.0).reshape(B, 1, 1, S1)
    attention_mask2 = ((1.0 - keep2) * -10000.0).reshape(B, 1, 1, S2)

    def mk_linear(k, dout, din):
        kw, kb = jax.random.split(k)
        w = jax.random.normal(kw, (dout, din), dtype=jnp.float32) / jnp.sqrt(din)
        b = jax.random.normal(kb, (dout,), dtype=jnp.float32) * 0.02
        return w, b

    wq1, bq1 = mk_linear(keys[4], bi_hidden, v_hidden)
    wk1, bk1 = mk_linear(keys[5], bi_hidden, v_hidden)
    wv1, bv1 = mk_linear(keys[6], bi_hidden, v_hidden)
    wq2, bq2 = mk_linear(keys[7], bi_hidden, hidden)
    wk2, bk2 = mk_linear(keys[8], bi_hidden, hidden)
    wv2, bv2 = mk_linear(keys[9], bi_hidden, hidden)

    torch_weights = (wq1, bq1, wk1, bk1, wv1, bv1, wq2, bq2, wk2, bk2, wv2, bv2)
    params = prepare_params(*torch_weights, num_attention_heads=num_heads)

    ctx1, ctx2, attn_data = bert_bi_attention(
        input_tensor1, attention_mask1, input_tensor2, attention_mask2,
        params, num_attention_heads=num_heads)
    ctx1, ctx2 = jax.block_until_ready((ctx1, ctx2))

    ref1, ref2 = reference(input_tensor1, attention_mask1,
                           input_tensor2, attention_mask2,
                           torch_weights, num_heads)

    assert ctx1.shape == (B, S2, bi_hidden)
    assert ctx2.shape == (B, S1, bi_hidden)
    assert attn_data is None
    # Tolerances relaxed slightly vs pure-f32: softmax normalization uses the EUP
    # approximate reciprocal (per perf review).
    assert jnp.allclose(ctx1, ref1, atol=1e-2, rtol=1e-2)
    assert jnp.allclose(ctx2, ref2, atol=1e-2, rtol=1e-2)
    print("KERNEL_OK")
</pallas_src>

<mosaic_0001>
module attributes {stable_mosaic.version = 11 : i64} {
  func.func @qkv_proj_kernel(%arg0: i32, %arg1: memref<32x64xf32, #tpu.memory_space<vmem>>, %arg2: memref<64x384xf32, #tpu.memory_space<vmem>>, %arg3: memref<1x384xf32, #tpu.memory_space<vmem>>, %arg4: memref<32x384xf32, #tpu.memory_space<vmem>>) attributes {dimension_semantics = [#tpu.dimension_semantics<parallel>], iteration_bounds = array<i64: 1>, scalar_prefetch = 0 : i64, scratch_operands = 0 : i64, tpu.core_type = #tpu.core_type<tc>, window_params = [{transform_indices = @transform_0, window_bounds = array<i64: 32, 64>}, {pipeline_mode = #tpu.pipeline_mode<synchronous>, transform_indices = @transform_1, window_bounds = array<i64: 64, 384>}, {pipeline_mode = #tpu.pipeline_mode<synchronous>, transform_indices = @transform_2, window_bounds = array<i64: 1, 384>}, {transform_indices = @transform_3, window_bounds = array<i64: 32, 384>}]} {
    %c0 = arith.constant 0 : index
    %c0_0 = arith.constant 0 : index
    %0 = vector.load %arg1[%c0, %c0_0] : memref<32x64xf32, #tpu.memory_space<vmem>>, vector<32x64xf32>
    %c0_1 = arith.constant 0 : index
    %c0_2 = arith.constant 0 : index
    %1 = vector.load %arg2[%c0_1, %c0_2] : memref<64x384xf32, #tpu.memory_space<vmem>>, vector<64x384xf32>
    %cst = arith.constant dense<0.000000e+00> : vector<32x384xf32>
    %2 = tpu.matmul %0, %1, %cst {dimension_numbers = #tpu.dot_dimension_numbers<[1], [0], [0], [1], [0, 0, 1, 1], [], []>} : vector<32x64xf32>, vector<64x384xf32>, vector<32x384xf32> -> vector<32x384xf32>
    %c0_3 = arith.constant 0 : index
    %c0_4 = arith.constant 0 : index
    %3 = vector.load %arg3[%c0_3, %c0_4] : memref<1x384xf32, #tpu.memory_space<vmem>>, vector<1x384xf32>
    %4 = vector.broadcast %3 : vector<1x384xf32> to vector<32x384xf32>
    %5 = arith.addf %2, %4 : vector<32x384xf32>
    %c0_5 = arith.constant 0 : index
    %c0_6 = arith.constant 0 : index
    %6 = vector.load %arg4[%c0_5, %c0_6] : memref<32x384xf32, #tpu.memory_space<vmem>>, vector<32x384xf32>
    tpu.vector_store %arg4[%c0_5, %c0_6], %5 {strides = array<i32>} : memref<32x384xf32, #tpu.memory_space<vmem>>, vector<32x384xf32>,
    return
  }
  func.func @transform_0(%arg0: i32) -> (i32, i32) {
    %c0_i32 = arith.constant 0 : i32
    %c0_i32_0 = arith.constant 0 : i32
    return %arg0, %c0_i32 : i32, i32
  }
  func.func @transform_1(%arg0: i32) -> (i32, i32) {
    %c0_i32 = arith.constant 0 : i32
    %c0_i32_0 = arith.constant 0 : i32
    %c0_i32_1 = arith.constant 0 : i32
    return %c0_i32, %c0_i32_0 : i32, i32
  }
  func.func @transform_2(%arg0: i32) -> (i32, i32) {
    %c0_i32 = arith.constant 0 : i32
    %c0_i32_0 = arith.constant 0 : i32
    %c0_i32_1 = arith.constant 0 : i32
    return %c0_i32, %c0_i32_0 : i32, i32
  }
  func.func @transform_3(%arg0: i32) -> (i32, i32) {
    %c0_i32 = arith.constant 0 : i32
    %c0_i32_0 = arith.constant 0 : i32
    return %arg0, %c0_i32 : i32, i32
  }
}

</mosaic_0001>

<llo_original>
// kernel: tpu_custom_call.1
$region0: #{tpu_custom_call.1}
  #allocation0 [shape = 'u32[]', space=smem, size = 0x4, offset = 0x4, fixed_abs, tag = 'smem constant byte address 0x4 - core index']
  #allocation1 [shape = 'u32[144,128]{1,0:T(1,128)}', space=vmem, size = 0x12000, scoped, tag = 'internal scratch']
  %s0 = inlined_call_operand.hbm [shape: f32[32,64], index: 0, kind: input, shape index: {}]
  %s1 = inlined_call_operand.hbm [shape: f32[64,384], index: 1, kind: input, shape index: {}]
  %s2 = inlined_call_operand.vmem [shape: f32[1,384], index: 2, kind: input, shape index: {}]
  %s3 = inlined_call_operand.hbm [shape: f32[32,384], index: 3, kind: output, shape index: {}]
  %s4 = sld [smem:[#allocation0]]
  $region30: #{tpu_custom_call.1} parent=0
    _
  %s6 = ssub.s32 1, %s4
  %s7 = scalar_select 0, %s6, %s4
  $region1: #{tpu_custom_call.1} parent=0
    #allocation2 [shape = 'u8[16384]{0}', space=vmem, size = 0x4000, scoped, tag = 'input window, operand 0, single buffered']
    #allocation3 [shape = 's32[1]{0}', space=sflag, size = 0x4, scoped, tag = 'scoped memory for tpu_custom_call.1']
    #allocation4 [shape = 's32[1]{0}', space=sflag, size = 0x4, scoped, tag = 'scoped memory for tpu_custom_call.1']
    #allocation5 [shape = 'u8[98304]{0}', space=vmem, size = 0x18000, scoped, tag = 'input window, operand 1, single buffered']
    #allocation6 [shape = 's32[1]{0}', space=sflag, size = 0x4, scoped, tag = 'scoped memory for tpu_custom_call.1']
    #allocation7 [shape = 'u8[49152]{0}', space=vmem, size = 0xc000, scoped, tag = 'output window, operand 0, single buffered']
    %8 = vsyncpa [#allocation3], 0
    %9 = vsyncpa [#allocation6], 0
    %10 = vsyncpa [#allocation4], 0
    // Predicated region
    $region2: #{tpu_custom_call.1} parent=1 // pred_check
      _
    $region3: #{tpu_custom_call.1} parent=1 // pred_check_branch
      %12 = sbr.rel (0) target = $region5
    $region4: #{tpu_custom_call.1} parent=1 // pred_region
      %s14 = ssub.s32 512, 512
      %15 = vsyncadd [#allocation3], %s14
      %s16 = sshll.u32 [#allocation2], 4
      %s17 = int_to_ptr.vmem [resolvable:$true] %s16
      %22 = dma.hbm_to_vmem [thread:$0]  %s0, 512, %s17, [#allocation3], 128, 128, 8
    $region5: #{tpu_custom_call.1} parent=1 // pred_fallthru
      _
    // Predicated region
    $region6: #{tpu_custom_call.1} parent=1 // pred_check
      _
    $region7: #{tpu_custom_call.1} parent=1 // pred_check_branch
      %24 = sbr.rel (0) target = $region9
    $region8: #{tpu_custom_call.1} parent=1 // pred_region
      %s26 = ssub.s32 3072, 3072
      %27 = vsyncadd [#allocation6], %s26
      %s28 = sshll.u32 [#allocation5], 4
      %s29 = int_to_ptr.vmem [resolvable:$true] %s28
      %34 = dma.hbm_to_vmem [thread:$0]  %s1, 3072, %s29, [#allocation6], 384, 384, 24
    $region9: #{tpu_custom_call.1} parent=1 // pred_fallthru
      _
    // Predicated region
    $region10: #{tpu_custom_call.1} parent=1 // pred_check
      _
    $region11: #{tpu_custom_call.1} parent=1 // pred_check_branch
      %36 = sbr.rel (0) target = $region13
    $region12: #{tpu_custom_call.1} parent=1 // pred_region
      _
    $region13: #{tpu_custom_call.1} parent=1 // pred_fallthru
      _
    // Predicated region
    $region14: #{tpu_custom_call.1} parent=1 // pred_check
      _
    $region15: #{tpu_custom_call.1} parent=1 // pred_check_branch
      %38 = sbr.rel (0) target = $region17
    $region16: #{tpu_custom_call.1} parent=1 // pred_region
      %39 = dma.done [#allocation3], 512
    $region17: #{tpu_custom_call.1} parent=1 // pred_fallthru
      _
    // Predicated region
    $region18: #{tpu_custom_call.1} parent=1 // pred_check
      _
    $region19: #{tpu_custom_call.1} parent=1 // pred_check_branch
      %41 = sbr.rel (0) target = $region21
    $region20: #{tpu_custom_call.1} parent=1 // pred_region
      %42 = dma.done [#allocation6], 3072
    $region21: #{tpu_custom_call.1} parent=1 // pred_fallthru
      _
    %v43 = vld [vmem:[#allocation2] sm:$0xff]
    %v44 = vld [vmem:[#allocation2 + $0x8] sm:$0xff]
    %v45 = vld [vmem:[#allocation2 + $0x10] sm:$0xff]
    %v46 = vld [vmem:[#allocation2 + $0x18] sm:$0xff]
    %v47 = vld [vmem:[#allocation5] sm:$0xff]
    %v48 = vld [vmem:[#allocation5 + $0x8] sm:$0xff]
    %v49 = vld [vmem:[#allocation5 + $0x10] sm:$0xff]
    %v50 = vld [vmem:[#allocation5 + $0x18] sm:$0xff]
    %v51 = vld [vmem:[#allocation5 + $0x20] sm:$0xff]
    %v52 = vld [vmem:[#allocation5 + $0x28] sm:$0xff]
    %v53 = vld [vmem:[#allocation5 + $0x30] sm:$0xff]
    %v54 = vld [vmem:[#allocation5 + $0x38] sm:$0xff]
    %v55 = vld [vmem:[#allocation5 + $0x40] sm:$0xff]
    %v56 = vld [vmem:[#allocation5 + $0x48] sm:$0xff]
    %v57 = vld [vmem:[#allocation5 + $0x50] sm:$0xff]
    %v58 = vld [vmem:[#allocation5 + $0x58] sm:$0xff]
    %v59 = vld [vmem:[#allocation5 + $0x60] sm:$0xff]
    %v60 = vld [vmem:[#allocation5 + $0x68] sm:$0xff]
    %v61 = vld [vmem:[#allocation5 + $0x70] sm:$0xff]
    %v62 = vld [vmem:[#allocation5 + $0x78] sm:$0xff]
    %v63 = vld [vmem:[#allocation5 + $0x80] sm:$0xff]
    %v64 = vld [vmem:[#allocation5 + $0x88] sm:$0xff]
    %v65 = vld [vmem:[#allocation5 + $0x90] sm:$0xff]
    %v66 = vld [vmem:[#allocation5 + $0x98] sm:$0xff]
    %v67 = vld [vmem:[#allocation5 + $0xa0] sm:$0xff]
    %v68 = vld [vmem:[#allocation5 + $0xa8] sm:$0xff]
    %v69 = vld [vmem:[#allocation5 + $0xb0] sm:$0xff]
    %v70 = vld [vmem:[#allocation5 + $0xb8] sm:$0xff]
    %v71 = vld [vmem:[%s2] sm:$0x7]
    %v73 = vlaneseq
    %v74 = vshrl.u32 %v73, 7
    %v75 = vsub.s32 0, %v74
    %v76 = vrot.slane %v71, %v75
    %v77 = vlaneseq
    %v78 = vshrl.u32 %v77, 7
    %v79 = vsub.s32 1, %v78
    %v80 = vrot.slane %v71, %v79
    %v81 = vlaneseq
    %v82 = vshrl.u32 %v81, 7
    %v83 = vsub.s32 2, %v82
    %v84 = vrot.slane %v71, %v83
    %vm88 = vcmask 523264
    %v90 = vsel %vm88, %v43, 0
    %v93 = vsel %vm88, %v44, 0
    %v96 = vsel %vm88, %v45, 0
    %v99 = vsel %vm88, %v46, 0
    %101 = vmatprep.subr.mxu0 0.0
    %102 = vmatpush1.msra.mxu0 0.0
    %103 = vmatprep.subr.mxu0 0.0
    %104 = vmatpush1.msra.mxu0 0.0
    %105 = vmatprep.subr.mxu0 0.0
    %106 = vmatpush1.msra.mxu0 0.0
    %107 = vmatprep.subr.mxu0 0.0
    %108 = vmatpush1.msra.mxu0 0.0
    %109 = vmatprep.subr.mxu0 0.0
    %110 = vmatpush1.msra.mxu0 0.0
    %111 = vmatprep.subr.mxu0 0.0
    %112 = vmatpush1.msra.mxu0 0.0
    %113 = vmatprep.subr.mxu0 0.0
    %114 = vmatpush1.msra.mxu0 0.0
    %115 = vmatprep.subr.mxu0 0.0
    %116 = vmatpush1.msra.mxu0 0.0
    %117 = vmatprep.subr.mxu0 %v69
    %118 = vmatpush1.msra.mxu0 %v68
    %119 = vmatprep.subr.mxu0 %v66
    %120 = vmatpush1.msra.mxu0 %v65
    %121 = vmatprep.subr.mxu0 %v63
    %122 = vmatpush1.msra.mxu0 %v62
    %123 = vmatprep.subr.mxu0 %v60
    %124 = vmatpush1.msra.mxu0 %v59
    %125 = vmatprep.subr.mxu0 %v57
    %126 = vmatpush1.msra.mxu0 %v56
    %127 = vmatprep.subr.mxu0 %v54
    %128 = vmatpush1.msra.mxu0 %v53
    %129 = vmatprep.subr.mxu0 %v51
    %130 = vmatpush1.msra.mxu0 %v50
    %131 = vmatprep.subr.mxu0 %v48
    %132 = vmatpush1.msra.mxu0 %v47
    %133 = vmatprep.subr.mxu0 0.0
    %134 = vmatpush2.msra.mxu0 0.0
    %135 = vmatprep.subr.mxu0 0.0
    %136 = vmatpush2.msra.mxu0 0.0
    %137 = vmatprep.subr.mxu0 0.0
    %138 = vmatpush2.msra.mxu0 0.0
    %139 = vmatprep.subr.mxu0 0.0
    %140 = vmatpush2.msra.mxu0 0.0
    %141 = vmatprep.subr.mxu0 0.0
    %142 = vmatpush2.msra.mxu0 0.0
    %143 = vmatprep.subr.mxu0 0.0
    %144 = vmatpush2.msra.mxu0 0.0
    %145 = vmatprep.subr.mxu0 0.0
    %146 = vmatpush2.msra.mxu0 0.0
    %147 = vmatprep.subr.mxu0 0.0
    %148 = vmatpush2.msra.mxu0 0.0
    %149 = vmatprep.subr.mxu0 0.0
    %150 = vmatpush2.msra.mxu0 0.0
    %151 = vmatprep.subr.mxu0 0.0
    %152 = vmatpush2.msra.mxu0 0.0
    %153 = vmatprep.subr.mxu0 0.0
    %154 = vmatpush2.msra.mxu0 0.0
    %155 = vmatprep.subr.mxu0 0.0
    %156 = vmatpush2.msra.mxu0 0.0
    %157 = vmatprep.subr.mxu0 0.0
    %158 = vmatpush2.msra.mxu0 0.0
    %159 = vmatprep.subr.mxu0 0.0
    %160 = vmatpush2.msra.mxu0 0.0
    %161 = vmatprep.subr.mxu0 0.0
    %162 = vmatpush2.msra.mxu0 0.0
    %163 = vmatprep.subr.mxu0 0.0
    %164 = vmatpush2.msra.mxu0 0.0
    %165 = vmatprep.mubr.f32.mxu0 0.0
    %166 = vmatmul.mubr.f32.gmra.mxu0 %v90
    %v167 = vpop.f32.mrf.mxu0
    %v168 = vadd.f32 %v76, %v167
    %v169 = vpop.f32.mrf.mxu0
    %v170 = vadd.f32 %v80, %v169
    %171 = vmatprep.mubr.f32.mxu0 0.0
    %172 = vmatmul.mubr.f32.gmra.mxu0 %v93
    %v173 = vpop.f32.mrf.mxu0
    %v174 = vadd.f32 %v76, %v173
    %v175 = vpop.f32.mrf.mxu0
    %v176 = vadd.f32 %v80, %v175
    %177 = vmatprep.mubr.f32.mxu0 0.0
    %178 = vmatmul.mubr.f32.gmra.mxu0 %v96
    %v179 = vpop.f32.mrf.mxu0
    %v180 = vadd.f32 %v76, %v179
    %v181 = vpop.f32.mrf.mxu0
    %v182 = vadd.f32 %v80, %v181
    %183 = vmatprep.mubr.f32.mxu0 0.0
    %184 = vmatmul.mubr.f32.gmra.mxu0 %v99
    %v185 = vpop.f32.mrf.mxu0
    %v186 = vadd.f32 %v76, %v185
    %v187 = vpop.f32.mrf.mxu0
    %v188 = vadd.f32 %v80, %v187
    %189 = vdwg.mxu0
    %190 = vmatprep.subr.mxu0 0.0
    %191 = vmatpush1.msra.mxu0 0.0
    %192 = vmatprep.subr.mxu0 0.0
    %193 = vmatpush1.msra.mxu0 0.0
    %194 = vmatprep.subr.mxu0 0.0
    %195 = vmatpush1.msra.mxu0 0.0
    %196 = vmatprep.subr.mxu0 0.0
    %197 = vmatpush1.msra.mxu0 0.0
    %198 = vmatprep.subr.mxu0 0.0
    %199 = vmatpush1.msra.mxu0 0.0
    %200 = vmatprep.subr.mxu0 0.0
    %201 = vmatpush1.msra.mxu0 0.0
    %202 = vmatprep.subr.mxu0 0.0
    %203 = vmatpush1.msra.mxu0 0.0
    %204 = vmatprep.subr.mxu0 0.0
    %205 = vmatpush1.msra.mxu0 0.0
    %206 = vmatprep.subr.mxu0 0.0
    %207 = vmatpush1.msra.mxu0 %v70
    %208 = vmatprep.subr.mxu0 0.0
    %209 = vmatpush1.msra.mxu0 %v67
    %210 = vmatprep.subr.mxu0 0.0
    %211 = vmatpush1.msra.mxu0 %v64
    %212 = vmatprep.subr.mxu0 0.0
    %213 = vmatpush1.msra.mxu0 %v61
    %214 = vmatprep.subr.mxu0 0.0
    %215 = vmatpush1.msra.mxu0 %v58
    %216 = vmatprep.subr.mxu0 0.0
    %217 = vmatpush1.msra.mxu0 %v55
    %218 = vmatprep.subr.mxu0 0.0
    %219 = vmatpush1.msra.mxu0 %v52
    %220 = vmatprep.subr.mxu0 0.0
    %221 = vmatpush1.msra.mxu0 %v49
    %222 = vmatprep.subr.mxu0 0.0
    %223 = vmatpush2.msra.mxu0 0.0
    %224 = vmatprep.subr.mxu0 0.0
    %225 = vmatpush2.msra.mxu0 0.0
    %226 = vmatprep.subr.mxu0 0.0
    %227 = vmatpush2.msra.mxu0 0.0
    %228 = vmatprep.subr.mxu0 0.0
    %229 = vmatpush2.msra.mxu0 0.0
    %230 = vmatprep.subr.mxu0 0.0
    %231 = vmatpush2.msra.mxu0 0.0
    %232 = vmatprep.subr.mxu0 0.0
    %233 = vmatpush2.msra.mxu0 0.0
    %234 = vmatprep.subr.mxu0 0.0
    %235 = vmatpush2.msra.mxu0 0.0
    %236 = vmatprep.subr.mxu0 0.0
    %237 = vmatpush2.msra.mxu0 0.0
    %238 = vmatprep.subr.mxu0 0.0
    %239 = vmatpush2.msra.mxu0 0.0
    %240 = vmatprep.subr.mxu0 0.0
    %241 = vmatpush2.msra.mxu0 0.0
    %242 = vmatprep.subr.mxu0 0.0
    %243 = vmatpush2.msra.mxu0 0.0
    %244 = vmatprep.subr.mxu0 0.0
    %245 = vmatpush2.msra.mxu0 0.0
    %246 = vmatprep.subr.mxu0 0.0
    %247 = vmatpush2.msra.mxu0 0.0
    %248 = vmatprep.subr.mxu0 0.0
    %249 = vmatpush2.msra.mxu0 0.0
    %250 = vmatprep.subr.mxu0 0.0
    %251 = vmatpush2.msra.mxu0 0.0
    %252 = vmatprep.subr.mxu0 0.0
    %253 = vmatpush2.msra.mxu0 0.0
    %254 = vmatprep.mubr.f32.mxu0 0.0
    %255 = vmatmul.mubr.f32.gmra.mxu0 %v90
    %v256 = vpop.f32.mrf.mxu0
    %v257 = vadd.f32 %v84, %v256
    %v258 = vpop.f32.mrf.mxu0
    %259 = vmatprep.mubr.f32.mxu0 0.0
    %260 = vmatmul.mubr.f32.gmra.mxu0 %v93
    %v261 = vpop.f32.mrf.mxu0
    %v262 = vadd.f32 %v84, %v261
    %v263 = vpop.f32.mrf.mxu0
    %264 = vmatprep.mubr.f32.mxu0 0.0
    %265 = vmatmul.mubr.f32.gmra.mxu0 %v96
    %v266 = vpop.f32.mrf.mxu0
    %v267 = vadd.f32 %v84, %v266
    %v268 = vpop.f32.mrf.mxu0
    %269 = vmatprep.mubr.f32.mxu0 0.0
    %270 = vmatmul.mubr.f32.gmra.mxu0 %v99
    %v271 = vpop.f32.mrf.mxu0
    %v272 = vadd.f32 %v84, %v271
    %v273 = vpop.f32.mrf.mxu0
    %274 = vdwg.mxu0
    %275 = vst [vmem:[#allocation7] sm:$0xff] %v168
    %276 = vst [vmem:[#allocation7 + $0x8] sm:$0xff] %v170
    %277 = vst [vmem:[#allocation7 + $0x10] sm:$0xff] %v257
    %278 = vst [vmem:[#allocation7 + $0x18] sm:$0xff] %v174
    %279 = vst [vmem:[#allocation7 + $0x20] sm:$0xff] %v176
    %280 = vst [vmem:[#allocation7 + $0x28] sm:$0xff] %v262
    %281 = vst [vmem:[#allocation7 + $0x30] sm:$0xff] %v180
    %282 = vst [vmem:[#allocation7 + $0x38] sm:$0xff] %v182
    %283 = vst [vmem:[#allocation7 + $0x40] sm:$0xff] %v267
    %284 = vst [vmem:[#allocation7 + $0x48] sm:$0xff] %v186
    %285 = vst [vmem:[#allocation7 + $0x50] sm:$0xff] %v188
    %286 = vst [vmem:[#allocation7 + $0x58] sm:$0xff] %v272
    // Predicated region
    $region22: #{tpu_custom_call.1} parent=1 // pred_check
      _
    $region23: #{tpu_custom_call.1} parent=1 // pred_check_branch
      %288 = sbr.rel (0) target = $region25
    $region24: #{tpu_custom_call.1} parent=1 // pred_region
      %s290 = ssub.s32 1536, 1536
      %291 = vsyncadd [#allocation4], %s290
      %s292 = sshll.u32 [#allocation7], 4
      %s293 = int_to_ptr.vmem [resolvable:$true] %s292
      %298 = dma.vmem_to_hbm [thread:$0]  %s293, 1536, %s3, [#allocation4], 384, 384, 24
    $region25: #{tpu_custom_call.1} parent=1 // pred_fallthru
      _
    // Predicated region
    $region26: #{tpu_custom_call.1} parent=1 // pred_check
      _
    $region27: #{tpu_custom_call.1} parent=1 // pred_check_branch
      %300 = sbr.rel (0) target = $region29
    $region28: #{tpu_custom_call.1} parent=1 // pred_region
      %301 = dma.done [#allocation4], 1536
    $region29: #{tpu_custom_call.1} parent=1 // pred_fallthru
      _
    %302 = vsyncpa [#allocation3], 1
    %303 = vsyncpa [#allocation6], 1
    %304 = vsyncpa [#allocation4], 1

</llo_original>
